<compile_context>
chip_gen: v7x
topology: tpu7x:2x2x1
jax: 0.10.0
libtpu: 0.0.40
codegen_flags: <defaults>
</compile_context>

<pallas_src>
import math
from functools import partial

import jax
import jax.numpy as jnp
from jax import lax
from jax.experimental import pallas as pl
from jax.experimental.pallas import tpu as pltpu

# Safe because KV block 0 is always processed first (so m is finite before any
# partially-masked row update) and, with top-left causal alignment, every query
# row has at least one unmasked key.  Do NOT reverse the KV iteration order.
_NEG_INF = -1e30


def _flash_cross_attn_kernel(q_ref, k_ref, v_ref, o_ref,
                             qs_sc, m_sc, l_sc, acc_sc,
                             *, scale, causal, block_q, block_k):
    """Online-softmax flash attention over (Q block, KV block) tiles.

    grid = (B*H, Sq // block_q, Sk // block_k); the KV axis is the reduction
    ('arbitrary') axis.
      q_ref : (block_q, D)  query tile (resident across the KV axis)
      k_ref : (block_k, D)  key tile
      v_ref : (block_k, D)  value tile
      o_ref : (block_q, D)  output tile
      qs_sc : (block_q, D)  pre-scaled query (written once per Q tile)
      m_sc, l_sc : (block_q, 1) f32 running max / denominator
      acc_sc     : (block_q, D) f32 running numerator
    """
    qi = pl.program_id(1)
    ki = pl.program_id(2)

    @pl.when(ki == 0)
    def _init():
        # Hoist the softmax scale out of the KV loop: one (tq, D) multiply per
        # Q tile instead of a (tq, tk) multiply per KV step.
        qs_sc[...] = (q_ref[...] * scale).astype(qs_sc.dtype)
        m_sc[...] = jnp.full_like(m_sc, -jnp.inf)
        l_sc[...] = jnp.zeros_like(l_sc)
        acc_sc[...] = jnp.zeros_like(acc_sc)

    def _make_update(masked):
        def _update():
            # bf16 x bf16 -> f32 accumulate on the MXU.
            s = jnp.einsum('qd,kd->qk', qs_sc[...], k_ref[...],
                           preferred_element_type=jnp.float32)
            if masked:
                # Top-left aligned causal mask (keep k_idx <= q_idx), matching
                # the module's CrossAttention triu(full((Sq,Sk),-1e4),1)
                # semantics / flash_attn v1's kvpacked func.
                # TODO(synk): flash-attn v2 uses bottom-right alignment for
                # Sq != Sk; shift `offs` by (Sk - Sq) if that is required.
                offs = qi * block_q - ki * block_k
                q_ids = lax.broadcasted_iota(jnp.int32, (block_q, 1), 0) + offs
                k_ids = lax.broadcasted_iota(jnp.int32, (1, block_k), 1)
                s = jnp.where(k_ids <= q_ids, s, _NEG_INF)

            m_prev = m_sc[...]
            m_new = jnp.maximum(m_prev, s.max(axis=-1, keepdims=True))
            alpha = jnp.exp(m_prev - m_new)
            p = jnp.exp(s - m_new)

            l_sc[...] = alpha * l_sc[...] + p.sum(axis=-1, keepdims=True)
            # Cast p to the value dtype (bf16) so P@V runs in the MXU's native
            # bf16-in / f32-accumulate mode.
            acc_sc[...] = alpha * acc_sc[...] + jnp.einsum(
                'qk,kd->qd', p.astype(v_ref.dtype), v_ref[...],
                preferred_element_type=jnp.float32)
            m_sc[...] = m_new
        return _update

    if causal:
        q_lo = qi * block_q
        q_hi = (qi + 1) * block_q           # exclusive
        k_lo = ki * block_k
        k_hi = (ki + 1) * block_k           # exclusive
        visible = k_lo < q_hi               # block not entirely above diagonal
        fully_visible = (k_hi - 1) <= q_lo  # block entirely at/below diagonal
        # Mutually exclusive branches; only one executes at runtime.  Blocks
        # entirely above the diagonal skip all FLOPs (and their DMA is elided
        # by the clamped index_map in the wrapper).
        pl.when(jnp.logical_and(visible, jnp.logical_not(fully_visible)))(
            _make_update(True))
        pl.when(fully_visible)(_make_update(False))
    else:
        _make_update(False)()

    @pl.when(ki == pl.num_programs(2) - 1)
    def _finalize():
        # Exact reciprocal: runs once per Q tile, off the hot loop.
        o_ref[...] = (acc_sc[...] * (1.0 / l_sc[...])).astype(o_ref.dtype)


def _default_block_sizes():
    """Per-generation tile defaults (see perf notes at top of file)."""
    try:
        kind = jax.devices()[0].device_kind.lower()
    except Exception:  # pragma: no cover - defensive
        kind = ""
    if ("v5 lite" in kind) or ("v5e" in kind) or ("v5litepod" in kind):
        # v5e: ~240 fl/B balance, 4x128x128 MXU, f32-only VALU -> 256 is best.
        return 256, 256
    # v6e / v7x (and unknown): larger Q tile to escape the K/V bandwidth wall;
    # larger KV tile to shrink the number of online-softmax rescale passes.
    # VMEM footprint stays ~2 MiB, far under the scoped limit on all gens.
    return 512, 512


def flash_cross_attention(q, kv, *, softmax_scale=None, causal=False,
                          block_q=None, block_k=None):
    """JAX/Pallas equivalent of FlashCrossAttention.forward (dropout 0 / eval).

    q  : (B, Sq, H, D)    float16 / bfloat16 / float32
    kv : (B, Sk, 2, H, D) same dtype
    returns (B, Sq, H, D) in the input dtype
    """
    orig_dtype = q.dtype
    if q.dtype == jnp.float16:
        # TPU has no native fp16 MXU/VPU path; compute in bf16, cast back.
        q = q.astype(jnp.bfloat16)
        kv = kv.astype(jnp.bfloat16)
    assert q.dtype in (jnp.bfloat16, jnp.float32)

    B, Sq, H, D = q.shape
    Sk = kv.shape[1]
    assert kv.shape == (B, Sk, 2, H, D)

    scale = float(softmax_scale) if softmax_scale is not None else 1.0 / math.sqrt(D)

    dq, dk = _default_block_sizes()
    block_q = dq if block_q is None else block_q
    block_k = dk if block_k is None else block_k

    tq = min(block_q, Sq)
    tk = min(block_k, Sk)
    assert Sq % tq == 0, "Sq must be divisible by the Q block size"
    assert Sk % tk == 0, "Sk must be divisible by the KV block size"
    n_q = Sq // tq
    n_k = Sk // tk

    # (B, Sq, H, D) -> (B*H, Sq, D): head dim on lanes, sequence on sublanes.
    q_r = jnp.transpose(q, (0, 2, 1, 3)).reshape(B * H, Sq, D)
    # Single transpose of the whole kv -> (2, B*H, Sk, D); the K / V planes are
    # then selected by the BlockSpec index_maps (no slice copies).
    kv_r = jnp.transpose(kv, (2, 0, 3, 1, 4)).reshape(2, B * H, Sk, D)

    if causal:
        # Clamp the KV block index to the last block this Q tile can see, so
        # above-diagonal KV blocks are never DMA'd (repeated block indices on
        # consecutive steps elide the fetch).
        def kv_block(qi, ki):
            return jnp.minimum(ki, ((qi + 1) * tq - 1) // tk)
    else:
        def kv_block(qi, ki):
            return ki

    kernel = partial(_flash_cross_attn_kernel,
                     scale=scale, causal=causal, block_q=tq, block_k=tk)

    out_r = pl.pallas_call(
        kernel,
        out_shape=jax.ShapeDtypeStruct((B * H, Sq, D), q.dtype),
        grid_spec=pltpu.PrefetchScalarGridSpec(
            num_scalar_prefetch=0,
            # First two axes are parallel -> on v7x the megacore shards them
            # across both TensorCores as long as B*H*n_q >= 2.
            grid=(B * H, n_q, n_k),
            in_specs=[
                # Leading (batch*head) dim squeezed -> 2D tiles in the kernel.
                pl.BlockSpec((None, tq, D), lambda b, qi, ki: (b, qi, 0)),   # q
                # kv_r passed twice; plane 0 = K, plane 1 = V.
                pl.BlockSpec((None, None, tk, D),
                             lambda b, qi, ki: (0, b, kv_block(qi, ki), 0)),  # k
                pl.BlockSpec((None, None, tk, D),
                             lambda b, qi, ki: (1, b, kv_block(qi, ki), 0)),  # v
            ],
            out_specs=pl.BlockSpec((None, tq, D), lambda b, qi, ki: (b, qi, 0)),
            scratch_shapes=[
                pltpu.VMEM((tq, D), q.dtype),       # pre-scaled Q tile
                pltpu.VMEM((tq, 1), jnp.float32),   # running max m
                pltpu.VMEM((tq, 1), jnp.float32),   # running denom l
                pltpu.VMEM((tq, D), jnp.float32),   # running numerator acc
            ],
        ),
        # Per-step VMEM is ~2 MiB even at tq=tk=512, D=128 -- well under the
        # scoped VMEM default on v5e/v6e/v7x, so no vmem_limit_bytes override.
        compiler_params=pltpu.CompilerParams(
            dimension_semantics=("parallel", "parallel", "arbitrary")),
    )(q_r, kv_r, kv_r)

    out = jnp.transpose(out_r.reshape(B, H, Sq, D), (0, 2, 1, 3))
    return out if out.dtype == orig_dtype else out.astype(orig_dtype)


def _reference_attention(q, kv, *, softmax_scale=None, causal=False):
    """Pure-JAX reference (f32) for validation."""
    B, Sq, H, D = q.shape
    Sk = kv.shape[1]
    scale = softmax_scale if softmax_scale is not None else 1.0 / math.sqrt(D)
    qf = q.astype(jnp.float32)
    kf = kv[:, :, 0].astype(jnp.float32)
    vf = kv[:, :, 1].astype(jnp.float32)
    s = jnp.einsum('bqhd,bkhd->bhqk', qf, kf) * scale
    if causal:
        mask = jnp.tril(jnp.ones((Sq, Sk), dtype=bool))
        s = jnp.where(mask[None, None], s, -1e30)
    p = jax.nn.softmax(s, axis=-1)
    return jnp.einsum('bhqk,bkhd->bqhd', p, vf)


if __name__ == "__main__":
    # Small shapes consistent with the module's forward signature.
    B, Sq, Sk, H, D = 2, 16, 16, 4, 32
    dtype = jnp.bfloat16

    key = jax.random.PRNGKey(0)
    kq, kkv = jax.random.split(key)
    q = jax.random.normal(kq, (B, Sq, H, D), dtype=jnp.float32).astype(dtype)
    kv = jax.random.normal(kkv, (B, Sk, 2, H, D), dtype=jnp.float32).astype(dtype)

    ref = _reference_attention(q, kv, softmax_scale=None, causal=False)
    ref_c = _reference_attention(q, kv, softmax_scale=None, causal=True)

    # Tolerance is bf16-driven (inputs and P@V operand are bf16), not kernel error.
    TOL = 3e-2

    # block_q = block_k = 8 so both the Q-tile loop and the online-softmax KV
    # loop run over 2 blocks each (exercises init/update/finalize phases).
    out = flash_cross_attention(q, kv, softmax_scale=None, causal=False,
                                block_q=8, block_k=8)
    out = jax.block_until_ready(out)
    assert out.shape == (B, Sq, H, D)
    assert out.dtype == dtype
    err = float(jnp.max(jnp.abs(out.astype(jnp.float32) - ref)))
    assert err < TOL, f"non-causal max abs error {err}"

    # Causal path: exercises the DMA-clamped index_map, the fully-masked block
    # skip, the diagonal-straddling masked branch and the unmasked branch.
    out_c = flash_cross_attention(q, kv, softmax_scale=None, causal=True,
                                  block_q=8, block_k=8)
    out_c = jax.block_until_ready(out_c)
    err_c = float(jnp.max(jnp.abs(out_c.astype(jnp.float32) - ref_c)))
    assert err_c < TOL, f"causal max abs error {err_c}"

    # Auto (per-generation) tile defaults, clamped to the full sequence length.
    out_auto = flash_cross_attention(q, kv, softmax_scale=None, causal=False)
    out_auto = jax.block_until_ready(out_auto)
    err_auto = float(jnp.max(jnp.abs(out_auto.astype(jnp.float32) - ref)))
    assert err_auto < TOL, f"auto-tile max abs error {err_auto}"

    print("KERNEL_OK")
</pallas_src>

<mosaic_0001>
module attributes {stable_mosaic.version = 11 : i64} {
  func.func @_flash_cross_attn_kernel(%arg0: i32, %arg1: i32, %arg2: i32, %arg3: memref<1x8x32xbf16, #tpu.memory_space<vmem>>, %arg4: memref<1x1x8x32xbf16, #tpu.memory_space<vmem>>, %arg5: memref<1x1x8x32xbf16, #tpu.memory_space<vmem>>, %arg6: memref<1x8x32xbf16, #tpu.memory_space<vmem>>, %arg7: memref<8x32xbf16, #tpu.memory_space<vmem>>, %arg8: memref<8x1xf32, #tpu.memory_space<vmem>>, %arg9: memref<8x1xf32, #tpu.memory_space<vmem>>, %arg10: memref<8x32xf32, #tpu.memory_space<vmem>>) attributes {dimension_semantics = [#tpu.dimension_semantics<parallel>, #tpu.dimension_semantics<parallel>, #tpu.dimension_semantics<arbitrary>], iteration_bounds = array<i64: 8, 2, 2>, scalar_prefetch = 0 : i64, scratch_operands = 4 : i64, tpu.core_type = #tpu.core_type<tc>, window_params = [{transform_indices = @transform_0, window_bounds = array<i64: 1, 8, 32>}, {transform_indices = @transform_1, window_bounds = array<i64: 1, 1, 8, 32>}, {transform_indices = @transform_2, window_bounds = array<i64: 1, 1, 8, 32>}, {transform_indices = @transform_3, window_bounds = array<i64: 1, 8, 32>}]} {
    %c0_i32 = arith.constant 0 : i32
    %0 = arith.cmpi eq, %arg2, %c0_i32 : i32
    %1 = arith.extui %0 : i1 to i32
    %c0_i32_0 = arith.constant 0 : i32
    %2 = arith.cmpi ne, %1, %c0_i32_0 : i32
    scf.if %2 {
      %c0_26 = arith.constant 0 : index
      %c0_27 = arith.constant 0 : index
      %c0_28 = arith.constant 0 : index
      %35 = vector.load %arg3[%c0_26, %c0_27, %c0_28] : memref<1x8x32xbf16, #tpu.memory_space<vmem>>, vector<1x8x32xbf16>
      %36 = vector.shape_cast %35 : vector<1x8x32xbf16> to vector<8x32xbf16>
      %cst_29 = arith.constant 1.767580e-01 : bf16
      %37 = vector.broadcast %cst_29 : bf16 to vector<8x32xbf16>
      %38 = arith.mulf %36, %37 : vector<8x32xbf16>
      %c0_30 = arith.constant 0 : index
      %c0_31 = arith.constant 0 : index
      %39 = vector.load %arg7[%c0_30, %c0_31] : memref<8x32xbf16, #tpu.memory_space<vmem>>, vector<8x32xbf16>
      tpu.vector_store %arg7[%c0_30, %c0_31], %38 {strides = array<i32>} : memref<8x32xbf16, #tpu.memory_space<vmem>>, vector<8x32xbf16>,
      %cst_32 = arith.constant 0xFF800000 : f32
      %40 = vector.broadcast %cst_32 : f32 to vector<8x1xf32>
      %c0_33 = arith.constant 0 : index
      %c0_34 = arith.constant 0 : index
      %41 = vector.load %arg8[%c0_33, %c0_34] : memref<8x1xf32, #tpu.memory_space<vmem>>, vector<8x1xf32>
      tpu.vector_store %arg8[%c0_33, %c0_34], %40 {strides = array<i32>} : memref<8x1xf32, #tpu.memory_space<vmem>>, vector<8x1xf32>,
      %cst_35 = arith.constant 0.000000e+00 : f32
      %42 = vector.broadcast %cst_35 : f32 to vector<8x1xf32>
      %c0_36 = arith.constant 0 : index
      %c0_37 = arith.constant 0 : index
      %43 = vector.load %arg9[%c0_36, %c0_37] : memref<8x1xf32, #tpu.memory_space<vmem>>, vector<8x1xf32>
      tpu.vector_store %arg9[%c0_36, %c0_37], %42 {strides = array<i32>} : memref<8x1xf32, #tpu.memory_space<vmem>>, vector<8x1xf32>,
      %cst_38 = arith.constant 0.000000e+00 : f32
      %44 = vector.broadcast %cst_38 : f32 to vector<8x32xf32>
      %c0_39 = arith.constant 0 : index
      %c0_40 = arith.constant 0 : index
      %45 = vector.load %arg10[%c0_39, %c0_40] : memref<8x32xf32, #tpu.memory_space<vmem>>, vector<8x32xf32>
      tpu.vector_store %arg10[%c0_39, %c0_40], %44 {strides = array<i32>} : memref<8x32xf32, #tpu.memory_space<vmem>>, vector<8x32xf32>,
    } else {
    }
    %c0 = arith.constant 0 : index
    %c0_1 = arith.constant 0 : index
    %3 = vector.load %arg7[%c0, %c0_1] : memref<8x32xbf16, #tpu.memory_space<vmem>>, vector<8x32xbf16>
    %c0_2 = arith.constant 0 : index
    %c0_3 = arith.constant 0 : index
    %c0_4 = arith.constant 0 : index
    %c0_5 = arith.constant 0 : index
    %4 = vector.load %arg4[%c0_2, %c0_3, %c0_4, %c0_5] : memref<1x1x8x32xbf16, #tpu.memory_space<vmem>>, vector<1x1x8x32xbf16>
    %5 = vector.shape_cast %4 : vector<1x1x8x32xbf16> to vector<8x32xbf16>
    "tpu.trace_start"() <{level = 10 : i32, message = "qd,kd->qk"}> : () -> ()
    %cst = arith.constant dense<0.000000e+00> : vector<8x8xf32>
    %6 = tpu.matmul %3, %5, %cst {dimension_numbers = #tpu.dot_dimension_numbers<[1], [1], [0], [0], [0, 0, 1, 0], [], []>} : vector<8x32xbf16>, vector<8x32xbf16>, vector<8x8xf32> -> vector<8x8xf32>
    "tpu.trace_stop"() : () -> ()
    %c0_6 = arith.constant 0 : index
    %c0_7 = arith.constant 0 : index
    %7 = vector.load %arg8[%c0_6, %c0_7] : memref<8x1xf32, #tpu.memory_space<vmem>>, vector<8x1xf32>
    %cst_8 = arith.constant dense<0xFF800000> : vector<8xf32>
    %8 = vector.multi_reduction <maximumf>, %6, %cst_8 [1] : vector<8x8xf32> to vector<8xf32>
    %9 = vector.shape_cast %8 : vector<8xf32> to vector<8x1xf32>
    %10 = arith.maximumf %7, %9 : vector<8x1xf32>
    %11 = arith.subf %7, %10 : vector<8x1xf32>
    %12 = math.exp %11 : vector<8x1xf32>
    %13 = vector.broadcast %10 : vector<8x1xf32> to vector<8x8xf32>
    %14 = arith.subf %6, %13 : vector<8x8xf32>
    %15 = math.exp %14 : vector<8x8xf32>
    %c0_9 = arith.constant 0 : index
    %c0_10 = arith.constant 0 : index
    %16 = vector.load %arg9[%c0_9, %c0_10] : memref<8x1xf32, #tpu.memory_space<vmem>>, vector<8x1xf32>
    %17 = arith.mulf %12, %16 : vector<8x1xf32>
    %cst_11 = arith.constant dense<0.000000e+00> : vector<8xf32>
    %18 = vector.multi_reduction <add>, %15, %cst_11 [1] : vector<8x8xf32> to vector<8xf32>
    %19 = vector.shape_cast %18 : vector<8xf32> to vector<8x1xf32>
    %20 = arith.addf %17, %19 : vector<8x1xf32>
    %c0_12 = arith.constant 0 : index
    %c0_13 = arith.constant 0 : index
    %21 = vector.load %arg9[%c0_12, %c0_13] : memref<8x1xf32, #tpu.memory_space<vmem>>, vector<8x1xf32>
    tpu.vector_store %arg9[%c0_12, %c0_13], %20 {strides = array<i32>} : memref<8x1xf32, #tpu.memory_space<vmem>>, vector<8x1xf32>,
    %c0_14 = arith.constant 0 : index
    %c0_15 = arith.constant 0 : index
    %22 = vector.load %arg10[%c0_14, %c0_15] : memref<8x32xf32, #tpu.memory_space<vmem>>, vector<8x32xf32>
    %23 = vector.broadcast %12 : vector<8x1xf32> to vector<8x32xf32>
    %24 = arith.mulf %23, %22 : vector<8x32xf32>
    %25 = arith.truncf %15 : vector<8x8xf32> to vector<8x8xbf16>
    %c0_16 = arith.constant 0 : index
    %c0_17 = arith.constant 0 : index
    %c0_18 = arith.constant 0 : index
    %c0_19 = arith.constant 0 : index
    %26 = vector.load %arg5[%c0_16, %c0_17, %c0_18, %c0_19] : memref<1x1x8x32xbf16, #tpu.memory_space<vmem>>, vector<1x1x8x32xbf16>
    %27 = vector.shape_cast %26 : vector<1x1x8x32xbf16> to vector<8x32xbf16>
    "tpu.trace_start"() <{level = 10 : i32, message = "qk,kd->qd"}> : () -> ()
    %cst_20 = arith.constant dense<0.000000e+00> : vector<8x32xf32>
    %28 = tpu.matmul %25, %27, %cst_20 {dimension_numbers = #tpu.dot_dimension_numbers<[1], [0], [0], [1], [0, 0, 1, 1], [], []>} : vector<8x8xbf16>, vector<8x32xbf16>, vector<8x32xf32> -> vector<8x32xf32>
    "tpu.trace_stop"() : () -> ()
    %29 = arith.addf %24, %28 : vector<8x32xf32>
    %c0_21 = arith.constant 0 : index
    %c0_22 = arith.constant 0 : index
    %30 = vector.load %arg10[%c0_21, %c0_22] : memref<8x32xf32, #tpu.memory_space<vmem>>, vector<8x32xf32>
    tpu.vector_store %arg10[%c0_21, %c0_22], %29 {strides = array<i32>} : memref<8x32xf32, #tpu.memory_space<vmem>>, vector<8x32xf32>,
    %c0_23 = arith.constant 0 : index
    %c0_24 = arith.constant 0 : index
    %31 = vector.load %arg8[%c0_23, %c0_24] : memref<8x1xf32, #tpu.memory_space<vmem>>, vector<8x1xf32>
    tpu.vector_store %arg8[%c0_23, %c0_24], %10 {strides = array<i32>} : memref<8x1xf32, #tpu.memory_space<vmem>>, vector<8x1xf32>,
    %c1_i32 = arith.constant 1 : i32
    %32 = arith.cmpi eq, %arg2, %c1_i32 : i32
    %33 = arith.extui %32 : i1 to i32
    %c0_i32_25 = arith.constant 0 : i32
    %34 = arith.cmpi ne, %33, %c0_i32_25 : i32
    scf.if %34 {
      %c0_26 = arith.constant 0 : index
      %c0_27 = arith.constant 0 : index
      %35 = vector.load %arg10[%c0_26, %c0_27] : memref<8x32xf32, #tpu.memory_space<vmem>>, vector<8x32xf32>
      %c0_28 = arith.constant 0 : index
      %c0_29 = arith.constant 0 : index
      %36 = vector.load %arg9[%c0_28, %c0_29] : memref<8x1xf32, #tpu.memory_space<vmem>>, vector<8x1xf32>
      %cst_30 = arith.constant 1.000000e+00 : f32
      %37 = vector.broadcast %cst_30 : f32 to vector<8x1xf32>
      %38 = arith.divf %37, %36 : vector<8x1xf32>
      %39 = vector.broadcast %38 : vector<8x1xf32> to vector<8x32xf32>
      %40 = arith.mulf %35, %39 : vector<8x32xf32>
      %41 = arith.truncf %40 : vector<8x32xf32> to vector<8x32xbf16>
      %c0_31 = arith.constant 0 : index
      %c0_32 = arith.constant 0 : index
      %c0_33 = arith.constant 0 : index
      %42 = vector.load %arg6[%c0_31, %c0_32, %c0_33] : memref<1x8x32xbf16, #tpu.memory_space<vmem>>, vector<1x8x32xbf16>
      %43 = vector.shape_cast %42 : vector<1x8x32xbf16> to vector<8x32xbf16>
      %44 = vector.shape_cast %41 : vector<8x32xbf16> to vector<1x8x32xbf16>
      tpu.vector_store %arg6[%c0_31, %c0_32, %c0_33], %44 {strides = array<i32>} : memref<1x8x32xbf16, #tpu.memory_space<vmem>>, vector<1x8x32xbf16>,
    } else {
    }
    return
  }
  func.func @transform_0(%arg0: i32, %arg1: i32, %arg2: i32) -> (i32, i32, i32) {
    %c0_i32 = arith.constant 0 : i32
    %c0_i32_0 = arith.constant 0 : i32
    return %arg0, %arg1, %c0_i32 : i32, i32, i32
  }
  func.func @transform_1(%arg0: i32, %arg1: i32, %arg2: i32) -> (i32, i32, i32, i32) {
    %c0_i32 = arith.constant 0 : i32
    %c0_i32_0 = arith.constant 0 : i32
    %c0_i32_1 = arith.constant 0 : i32
    return %c0_i32, %arg0, %arg2, %c0_i32_0 : i32, i32, i32, i32
  }
  func.func @transform_2(%arg0: i32, %arg1: i32, %arg2: i32) -> (i32, i32, i32, i32) {
    %c1_i32 = arith.constant 1 : i32
    %c0_i32 = arith.constant 0 : i32
    %c0_i32_0 = arith.constant 0 : i32
    return %c1_i32, %arg0, %arg2, %c0_i32 : i32, i32, i32, i32
  }
  func.func @transform_3(%arg0: i32, %arg1: i32, %arg2: i32) -> (i32, i32, i32) {
    %c0_i32 = arith.constant 0 : i32
    %c0_i32_0 = arith.constant 0 : i32
    return %arg0, %arg1, %c0_i32 : i32, i32, i32
  }
}

</mosaic_0001>

<llo_original>
// kernel: tpu_custom_call.1
$region0: #{tpu_custom_call.1}
  #allocation0 [shape = 'u32[]', space=smem, size = 0x4, offset = 0x4, fixed_abs, tag = 'smem constant byte address 0x4 - core index']
  #allocation1 [shape = 'u32[144,128]{1,0:T(1,128)}', space=vmem, size = 0x12000, scoped, tag = 'internal scratch']
  #allocation2 [shape = 'bf16[8,32]{1,0:T(8,128)(2,1)}', space=vmem, size = 0x800, scoped, tag = 'scratch operand']
  #allocation3 [shape = 'f32[8,1]{1,0:T(8,128)}', space=vmem, size = 0x1000, scoped, tag = 'scratch operand']
  #allocation4 [shape = 'f32[8,1]{1,0:T(8,128)}', space=vmem, size = 0x1000, scoped, tag = 'scratch operand']
  #allocation5 [shape = 'f32[8,32]{1,0:T(8,128)}', space=vmem, size = 0x1000, scoped, tag = 'scratch operand']
  %s0 = inlined_call_operand.hbm [shape: bf16[8,16,32], index: 0, kind: input, shape index: {}]
  %s1 = inlined_call_operand.hbm [shape: bf16[2,8,16,32], index: 1, kind: input, shape index: {}]
  %s2 = inlined_call_operand.hbm [shape: bf16[2,8,16,32], index: 2, kind: input, shape index: {}]
  %s3 = inlined_call_operand.hbm [shape: bf16[8,16,32], index: 3, kind: output, shape index: {}]
  %s4 = sld [smem:[#allocation0]]
  $region65: #{tpu_custom_call.1} parent=0
    _
  %s6 = ssub.s32 1, %s4
  %s7 = scalar_select 0, %s6, %s4
  $region1: #{tpu_custom_call.1} parent=0
    #allocation6 [shape = 'u8[4096]{0}', space=vmem, size = 0x1000, scoped, tag = 'input window, operand 0']
    #allocation7 [shape = 's32[2]{0}', space=sflag, size = 0x8, scoped, tag = 'scoped memory for tpu_custom_call.1']
    #allocation8 [shape = 's32[2]{0}', space=sflag, size = 0x8, scoped, tag = 'scoped memory for tpu_custom_call.1']
    #allocation9 [shape = 'u8[4096]{0}', space=vmem, size = 0x1000, scoped, tag = 'input window, operand 1']
    #allocation10 [shape = 's32[2]{0}', space=sflag, size = 0x8, scoped, tag = 'scoped memory for tpu_custom_call.1']
    #allocation11 [shape = 'u8[4096]{0}', space=vmem, size = 0x1000, scoped, tag = 'input window, operand 2']
    #allocation12 [shape = 'u8[4096]{0}', space=vmem, size = 0x1000, scoped, tag = 'output window, operand 0']
    %8 = vsyncpa [#allocation7], 0
    %s9 = scalar_lea.sflag [#allocation7], 1
    %10 = vsyncpa %s9, 0
    %11 = vsyncpa [#allocation10], 0
    %s12 = scalar_lea.sflag [#allocation10], 1
    %13 = vsyncpa %s12, 0
    %14 = vsyncpa [#allocation8], 0
    %s15 = scalar_lea.sflag [#allocation8], 1
    %16 = vsyncpa %s15, 0
    loop: start=0, step=1, limit=34
    $region2: #{tpu_custom_call.1} parent=1 // loop_pre_header
      _
    $region3: #{tpu_custom_call.1} parent=1 // loop_header
      %s18 = sphi 0, %s22
      %p19 = scmp.ge.s32.totalorder %s18, 34
      %s25 = sphi 0, %s44
      %s26 = sphi 0, %s40
      %s27 = sphi 0, %s36
      %s28 = sphi 0, %s25
      %s29 = sphi 0, %s26
      %s30 = sphi 0, %s27
      %s31 = sphi 0, %s28
      %s32 = sphi 0, %s29
      %s33 = sphi 0, %s30
      %s49 = sphi 0, %s51
      %s52 = sphi 0, %s49
      %s53 = sphi 0, %s52
      %s69 = sphi 0, %s53
      %s77 = sphi 0, %s79
      %s80 = sphi 0, %s77
      %s81 = sphi 0, %s80
      %s97 = sphi 0, %s81
      %s105 = sphi 0, %s107
      %s108 = sphi 0, %s105
      %s109 = sphi 0, %s108
      %s125 = sphi 0, %s109
      %s133 = sphi 0, %s135
      %s136 = sphi 0, %s133
      %s137 = sphi 0, %s136
      %s153 = sphi 0, %s137
    $region4: #{tpu_custom_call.1} parent=1 // loop_header_branch
      %21 = sbr.rel (%p19) target = $region8
    $region5: #{tpu_custom_call.1} parent=1 // loop_body
      %s23 = ssub.s32 %s18, 1
      %s24 = ssub.s32 %s18, 2
      %s34 = sadd.s32 1, %s27
      %p35 = scmp.ge.s32.totalorder %s34, 2
      %s36 = scalar_select %p35, 0, %s34
      %s37 = sadd.s32 1, %s26
      %s38 = scalar_select %p35, %s37, %s26
      %p39 = scmp.ge.s32.totalorder %s38, 2
      %s40 = scalar_select %p39, 0, %s38
      %s41 = sadd.s32 1, %s25
      %s42 = scalar_select %p39, %s41, %s25
      %p43 = scmp.ge.s32.totalorder %s42, 8
      %s44 = scalar_select %p43, 0, %s42
      %s45 = ssub.s32 %s25, %s44
      %s46 = ssub.s32 %s26, %s40
      %s47 = sor.u32 %s45, %s46
      %p48 = scmp.eq.s32.totalorder %s47, 0
      %s50 = sadd.s32 %s49, 1
      %s51 = scalar_select %p48, %s49, %s50
      %p54 = pneg %p48
      %p55 = scmp.eq.s32.totalorder %s18, 31
      %p56 = por %p54, %p55
      %p57 = scmp.ne.s32.totalorder %s49, %s52
      %p58 = scmp.eq.s32.totalorder %s18, 0
      %p59 = por %p57, %p58
      %p60 = scmp.ne.s32.totalorder %s49, %s52
      %p61 = scmp.eq.s32.totalorder %s23, 31
      %p62 = por %p60, %p61
      %p63 = scmp.ne.s32.totalorder %s52, %s53
      %p64 = scmp.eq.s32.totalorder %s23, 0
      %p65 = por %p63, %p64
      %p66 = scmp.ne.s32.totalorder %s52, %s53
      %p67 = scmp.eq.s32.totalorder %s24, 31
      %p68 = por %p66, %p67
      %p70 = scmp.ne.s32.totalorder %s53, %s69
      %p71 = scmp.eq.s32.totalorder %s24, 0
      %p72 = por %p70, %p71
      %s73 = ssub.s32 %s25, %s44
      %s74 = ssub.s32 %s27, %s36
      %s75 = sor.u32 %s73, %s74
      %p76 = scmp.eq.s32.totalorder %s75, 0
      %s78 = sadd.s32 %s77, 1
      %s79 = scalar_select %p76, %s77, %s78
      %p82 = pneg %p76
      %p83 = scmp.eq.s32.totalorder %s18, 31
      %p84 = por %p82, %p83
      %p85 = scmp.ne.s32.totalorder %s77, %s80
      %p86 = scmp.eq.s32.totalorder %s18, 0
      %p87 = por %p85, %p86
      %p88 = scmp.ne.s32.totalorder %s77, %s80
      %p89 = scmp.eq.s32.totalorder %s23, 31
      %p90 = por %p88, %p89
      %p91 = scmp.ne.s32.totalorder %s80, %s81
      %p92 = scmp.eq.s32.totalorder %s23, 0
      %p93 = por %p91, %p92
      %p94 = scmp.ne.s32.totalorder %s80, %s81
      %p95 = scmp.eq.s32.totalorder %s24, 31
      %p96 = por %p94, %p95
      %p98 = scmp.ne.s32.totalorder %s81, %s97
      %p99 = scmp.eq.s32.totalorder %s24, 0
      %p100 = por %p98, %p99
      %s101 = ssub.s32 %s25, %s44
      %s102 = ssub.s32 %s27, %s36
      %s103 = sor.u32 %s101, %s102
      %p104 = scmp.eq.s32.totalorder %s103, 0
      %s106 = sadd.s32 %s105, 1
      %s107 = scalar_select %p104, %s105, %s106
      %p110 = pneg %p104
      %p111 = scmp.eq.s32.totalorder %s18, 31
      %p112 = por %p110, %p111
      %p113 = scmp.ne.s32.totalorder %s105, %s108
      %p114 = scmp.eq.s32.totalorder %s18, 0
      %p115 = por %p113, %p114
      %p116 = scmp.ne.s32.totalorder %s105, %s108
      %p117 = scmp.eq.s32.totalorder %s23, 31
      %p118 = por %p116, %p117
      %p119 = scmp.ne.s32.totalorder %s108, %s109
      %p120 = scmp.eq.s32.totalorder %s23, 0
      %p121 = por %p119, %p120
      %p122 = scmp.ne.s32.totalorder %s108, %s109
      %p123 = scmp.eq.s32.totalorder %s24, 31
      %p124 = por %p122, %p123
      %p126 = scmp.ne.s32.totalorder %s109, %s125
      %p127 = scmp.eq.s32.totalorder %s24, 0
      %p128 = por %p126, %p127
      %s129 = ssub.s32 %s25, %s44
      %s130 = ssub.s32 %s26, %s40
      %s131 = sor.u32 %s129, %s130
      %p132 = scmp.eq.s32.totalorder %s131, 0
      %s134 = sadd.s32 %s133, 1
      %s135 = scalar_select %p132, %s133, %s134
      %p138 = pneg %p132
      %p139 = scmp.eq.s32.totalorder %s18, 31
      %p140 = por %p138, %p139
      %p141 = scmp.ne.s32.totalorder %s133, %s136
      %p142 = scmp.eq.s32.totalorder %s18, 0
      %p143 = por %p141, %p142
      %p144 = scmp.ne.s32.totalorder %s133, %s136
      %p145 = scmp.eq.s32.totalorder %s23, 31
      %p146 = por %p144, %p145
      %p147 = scmp.ne.s32.totalorder %s136, %s137
      %p148 = scmp.eq.s32.totalorder %s23, 0
      %p149 = por %p147, %p148
      %p150 = scmp.ne.s32.totalorder %s136, %s137
      %p151 = scmp.eq.s32.totalorder %s24, 31
      %p152 = por %p150, %p151
      %p154 = scmp.ne.s32.totalorder %s137, %s153
      %p155 = scmp.eq.s32.totalorder %s24, 0
      %p156 = por %p154, %p155
      %p157 = scmp.le.s32.totalorder 1, %s18
      %p158 = scmp.lt.s32.totalorder %s18, 33
      %p159 = pnand %p157, %p158
      %p160 = pneg %p159
      // Predicated region
      $region9: #{tpu_custom_call.1} parent=5 // pred_check
        _
      $region10: #{tpu_custom_call.1} parent=5 // pred_check_branch
        %162 = sbr.rel (%p159) target = $region12
      $region11: #{tpu_custom_call.1} parent=5 // pred_region
        %s163 = ssub.s32 %s18, 1
      $region12: #{tpu_custom_call.1} parent=5 // pred_fallthru
        _
      %p164 = scmp.lt.s32.totalorder %s18, 32
      // Predicated region
      $region13: #{tpu_custom_call.1} parent=5 // pred_check
        %p165 = pneg %p164
      $region14: #{tpu_custom_call.1} parent=5 // pred_check_branch
        %167 = sbr.rel (%p165) target = $region16
      $region15: #{tpu_custom_call.1} parent=5 // pred_region
        // Predicated region
        $region17: #{tpu_custom_call.1} parent=15 // pred_check
          %p168 = pneg %p59
        $region18: #{tpu_custom_call.1} parent=15 // pred_check_branch
          %170 = sbr.rel (%p168) target = $region20
        $region19: #{tpu_custom_call.1} parent=15 // pred_region
          %s171 = sand.u32 %s49, 1
          %s172 = scalar_lea.sflag [#allocation7], %s171
          %s173 = sand.u32 %s49, 1
          %s174 = smul.addr %s173, 4
          %s175 = scalar_lea.vmem [#allocation6], %s174
          %s177 = ssub.s32 64, 64
          %178 = vsyncadd %s172, %s177
          %s179 = smul.addr %s25, 2
          %s180 = sadd.s32 %s26, %s179
          %s181 = smul.addr %s180, 64
          %s182 = scalar_lea.hbm %s0, %s181
          %s184 = sshll.u32 %s175, 4
          %s185 = int_to_ptr.vmem [resolvable:$true] %s184
          %187 = dma.hbm_to_vmem [thread:$0]  %s182, 64, %s185, %s172
        $region20: #{tpu_custom_call.1} parent=15 // pred_fallthru
          _
        // Predicated region
        $region21: #{tpu_custom_call.1} parent=15 // pred_check
          %p188 = pneg %p87
        $region22: #{tpu_custom_call.1} parent=15 // pred_check_branch
          %190 = sbr.rel (%p188) target = $region24
        $region23: #{tpu_custom_call.1} parent=15 // pred_region
          %s191 = sand.u32 %s18, 1
          %s192 = scalar_lea.sflag [#allocation10], %s191
          %s193 = sand.u32 %s77, 1
          %s194 = smul.addr %s193, 4
          %s195 = scalar_lea.vmem [#allocation9], %s194
          %s197 = ssub.s32 64, 64
          %198 = vsyncadd %s192, %s197
          %s199 = smul.addr %s25, 2
          %s200 = sadd.s32 %s27, %s199
          %s201 = smul.addr %s200, 64
          %s202 = scalar_lea.hbm %s1, %s201
          %s204 = sshll.u32 %s195, 4
          %s205 = int_to_ptr.vmem [resolvable:$true] %s204
          %207 = dma.hbm_to_vmem [thread:$0]  %s202, 64, %s205, %s192
        $region24: #{tpu_custom_call.1} parent=15 // pred_fallthru
          _
        // Predicated region
        $region25: #{tpu_custom_call.1} parent=15 // pred_check
          %p208 = pneg %p115
        $region26: #{tpu_custom_call.1} parent=15 // pred_check_branch
          %210 = sbr.rel (%p208) target = $region28
        $region27: #{tpu_custom_call.1} parent=15 // pred_region
          %s211 = sand.u32 %s18, 1
          %s212 = scalar_lea.sflag [#allocation10], %s211
          %s213 = sand.u32 %s105, 1
          %s214 = smul.addr %s213, 4
          %s215 = scalar_lea.vmem [#allocation11], %s214
          %s217 = ssub.s32 64, 64
          %218 = vsyncadd %s212, %s217
          %s219 = smul.addr %s25, 2
          %s220 = sadd.s32 %s27, %s219
          %s221 = sadd.s32 %s220, 16
          %s222 = smul.addr %s221, 64
          %s223 = scalar_lea.hbm %s2, %s222
          %s225 = sshll.u32 %s215, 4
          %s226 = int_to_ptr.vmem [resolvable:$true] %s225
          %228 = dma.hbm_to_vmem [thread:$0]  %s223, 64, %s226, %s212
        $region28: #{tpu_custom_call.1} parent=15 // pred_fallthru
          _
      $region16: #{tpu_custom_call.1} parent=5 // pred_fallthru
        _
      %p229 = scmp.le.s32.totalorder 1, %s18
      %p230 = scmp.lt.s32.totalorder %s18, 33
      %p231 = pnand %p229, %p230
      %p232 = pneg %p231
      // Predicated region
      $region29: #{tpu_custom_call.1} parent=5 // pred_check
        _
      $region30: #{tpu_custom_call.1} parent=5 // pred_check_branch
        %234 = sbr.rel (%p231) target = $region32
      $region31: #{tpu_custom_call.1} parent=5 // pred_region
        %s235 = ssub.s32 %s18, 1
        %s236 = sand.u32 %s52, 1
        %s237 = scalar_lea.sflag [#allocation7], %s236
        %s238 = sand.u32 %s52, 1
        %s239 = smul.addr %s238, 4
        %s240 = scalar_lea.vmem [#allocation6], %s239
        // Predicated region
        $region33: #{tpu_custom_call.1} parent=31 // pred_check
          %p241 = pneg %p65
        $region34: #{tpu_custom_call.1} parent=31 // pred_check_branch
          %243 = sbr.rel (%p241) target = $region36
        $region35: #{tpu_custom_call.1} parent=31 // pred_region
          %244 = dma.done %s237, 64
        $region36: #{tpu_custom_call.1} parent=31 // pred_fallthru
          _
        %s245 = sand.u32 %s23, 1
        %s246 = scalar_lea.sflag [#allocation10], %s245
        %s247 = sand.u32 %s80, 1
        %s248 = smul.addr %s247, 4
        %s249 = scalar_lea.vmem [#allocation9], %s248
        // Predicated region
        $region37: #{tpu_custom_call.1} parent=31 // pred_check
          %p250 = pneg %p93
        $region38: #{tpu_custom_call.1} parent=31 // pred_check_branch
          %252 = sbr.rel (%p250) target = $region40
        $region39: #{tpu_custom_call.1} parent=31 // pred_region
          %253 = dma.done %s246, 64
        $region40: #{tpu_custom_call.1} parent=31 // pred_fallthru
          _
        %s254 = sand.u32 %s23, 1
        %s255 = scalar_lea.sflag [#allocation10], %s254
        %s256 = sand.u32 %s108, 1
        %s257 = smul.addr %s256, 4
        %s258 = scalar_lea.vmem [#allocation11], %s257
        // Predicated region
        $region41: #{tpu_custom_call.1} parent=31 // pred_check
          %p259 = pneg %p121
        $region42: #{tpu_custom_call.1} parent=31 // pred_check_branch
          %261 = sbr.rel (%p259) target = $region44
        $region43: #{tpu_custom_call.1} parent=31 // pred_region
          %262 = dma.done %s255, 64
        $region44: #{tpu_custom_call.1} parent=31 // pred_fallthru
          _
        %s263 = sand.u32 %s52, 1
        %s264 = scalar_lea.sflag [#allocation7], %s263
        %s265 = sand.u32 %s52, 1
        %s266 = smul.addr %s265, 4
        %s267 = scalar_lea.vmem [#allocation6], %s266
        %p268 = pneg %p65
        %p269 = pneg %p62
        %s270 = sand.u32 %s23, 1
        %s271 = scalar_lea.sflag [#allocation10], %s270
        %s272 = sand.u32 %s80, 1
        %s273 = smul.addr %s272, 4
        %s274 = scalar_lea.vmem [#allocation9], %s273
        %p275 = pneg %p93
        %p276 = pneg %p90
        %s277 = sand.u32 %s23, 1
        %s278 = scalar_lea.sflag [#allocation10], %s277
        %s279 = sand.u32 %s108, 1
        %s280 = smul.addr %s279, 4
        %s281 = scalar_lea.vmem [#allocation11], %s280
        %p282 = pneg %p121
        %p283 = pneg %p118
        %p284 = pneg %p149
        %p285 = pneg %p146
        %s286 = sand.u32 %s136, 1
        %s287 = scalar_lea.sflag [#allocation8], %s286
        %s288 = sand.u32 %s136, 1
        %s289 = smul.addr %s288, 4
        %s290 = scalar_lea.vmem [#allocation12], %s289
        %p293 = scmp.eq.s32.totalorder %s30, 0
        // Predicated region
        $region45: #{tpu_custom_call.1} parent=31 // pred_check
          %p294 = pneg %p293
        $region46: #{tpu_custom_call.1} parent=31 // pred_check_branch
          %296 = sbr.rel (%p294) target = $region48
        $region47: #{tpu_custom_call.1} parent=31 // pred_region
          %v297 = vld [vmem:[%s240] sm:$0xf]
          %v298 = vmul.bf16 %v297, 1043676725
          %vm299 = vcmask 257024
          %300 = vst.msk [vmem:[#allocation2] sm:$0xf] %vm299, %v298
          %vm301 = vcmask 7168
          %302 = vst.msk [vmem:[#allocation3] sm:$0xff] %vm301, -inf
          %303 = vst.msk [vmem:[#allocation4] sm:$0xff] %vm301, 0.0
          %vm304 = vcmask 261120
          %305 = vst.msk [vmem:[#allocation5] sm:$0xff] %vm304, 0.0
        $region48: #{tpu_custom_call.1} parent=31 // pred_fallthru
          _
        %v306 = vld [vmem:[#allocation2] sm:$0xf]
        %v307 = vld [vmem:[%s249] sm:$0xf]
        %vm308 = vcmask 261120
        %v310 = vsel %vm308, %v306, 0
        %v313 = vsel %vm308, %v307, 0
        %315 = vmatprep.subr.bf16.mxu0 0
        %316 = vmatpush1.bf16.xpose.msra.mxu0 %v313
        %317 = vmatprep.subr.bf16.mxu0 0
        %318 = vmatpush1.bf16.xpose.msra.mxu0 0
        %319 = vmatprep.subr.bf16.mxu0 0
        %320 = vmatpush1.bf16.xpose.msra.mxu0 0
        %321 = vmatprep.subr.bf16.mxu0 0
        %322 = vmatpush1.bf16.xpose.msra.mxu0 0
        %323 = vmatprep.subr.bf16.mxu0 0
        %324 = vmatpush1.bf16.xpose.msra.mxu0 0
        %325 = vmatprep.subr.bf16.mxu0 0
        %326 = vmatpush1.bf16.xpose.msra.mxu0 0
        %327 = vmatprep.subr.bf16.mxu0 0
        %328 = vmatpush1.bf16.xpose.msra.mxu0 0
        %329 = vmatprep.subr.bf16.mxu0 0
        %330 = vmatpush1.bf16.xpose.msra.mxu0 0
        %331 = vmatprep.subr.bf16.mxu0 0
        %332 = vmatpush1.bf16.xpose.msra.mxu0 0
        %333 = vmatprep.subr.bf16.mxu0 0
        %334 = vmatpush1.bf16.xpose.msra.mxu0 0
        %335 = vmatprep.subr.bf16.mxu0 0
        %336 = vmatpush1.bf16.xpose.msra.mxu0 0
        %337 = vmatprep.subr.bf16.mxu0 0
        %338 = vmatpush1.bf16.xpose.msra.mxu0 0
        %339 = vmatprep.subr.bf16.mxu0 0
        %340 = vmatpush1.bf16.xpose.msra.mxu0 0
        %341 = vmatprep.subr.bf16.mxu0 0
        %342 = vmatpush1.bf16.xpose.msra.mxu0 0
        %343 = vmatprep.subr.bf16.mxu0 0
        %344 = vmatpush1.bf16.xpose.msra.mxu0 0
        %345 = vmatprep.subr.bf16.mxu0 0
        %346 = vmatpush1.bf16.xpose.msra.mxu0 0
        %347 = vmatprep.mubr.bf16.mxu0 0
        %348 = vmatmul.mubr.bf16.gmra.mrb[0].mxu0 %v310
        %v349 = vpop.f32.mrb[0].mxu0
        %v350 = vadd.f32 0.0, %v349
        %v351 = vpop.f32.mrb[0].mxu0
        %v352 = vpop.f32.mrb[0].mxu0
        %v353 = vpop.f32.mrb[0].mxu0
        %354 = vdwg.mxu0
        %v355 = vld [vmem:[#allocation3] sm:$0xff]
        %vm356 = vcmask 64512
        %v357 = vsel %vm356, %v350, -inf
        %358 = vmax.xlane.f32.xlu0 %v357
        %v359 = vpop.xlane.xlu0 %358
        %v360 = vmax.f32 %v355, %v359
        %v361 = vsub.f32 %v355, %v360
        %v362 = vmul.f32 %v361, 1.442695
        %v363 = vpow.pop %v362
        %365 = vset.pattern.permute.xlu0 0
        %366 = vperm.xlu0 %365, %v360
        %v367 = vpop.permute.xlu0 %366
        %v369 = vsub.f32 %v350, %v367
        %v370 = vmul.f32 %v369, 1.442695
        %v371 = vpow.pop %v370
        %v372 = vld [vmem:[#allocation4] sm:$0xff]
        %v373 = vmul.f32 %v363, %v372
        %v374 = vsel %vm356, %v371, 0.0
        %375 = vadd.xlane.f32.xlu0 %v374
        %v376 = vpop.xlane.xlu0 %375
        %v377 = vadd.f32 %v373, %v376
        %vm378 = vcmask 7168
        %379 = vst.msk [vmem:[#allocation4] sm:$0xff] %vm378, %v377
        %v380 = vld [vmem:[#allocation5] sm:$0xff]
        %382 = vset.pattern.permute.xlu0 0
        %383 = vperm.xlu0 %382, %v363
        %v384 = vpop.permute.xlu0 %383
        %v386 = vmul.f32 %v384, %v380
        %v387 = vpack.c.bf16 %v371, %v371
        %v388 = vld [vmem:[%s258] sm:$0xf]
        %v390 = vsel %vm356, %v387, 0
        %vm392 = vcmask 1043456
        %v394 = vsel %vm392, %v388, 0
        %396 = vmatprep.subr.bf16.mxu0 0
        %397 = vmatpush1.bf16.msra.mxu0 %v394
        %398 = vmatprep.subr.bf16.mxu0 0
        %399 = vmatpush1.bf16.msra.mxu0 0
        %400 = vmatprep.subr.bf16.mxu0 0
        %401 = vmatpush1.bf16.msra.mxu0 0
        %402 = vmatprep.subr.bf16.mxu0 0
        %403 = vmatpush1.bf16.msra.mxu0 0
        %404 = vmatprep.subr.bf16.mxu0 0
        %405 = vmatpush1.bf16.msra.mxu0 0
        %406 = vmatprep.subr.bf16.mxu0 0
        %407 = vmatpush1.bf16.msra.mxu0 0
        %408 = vmatprep.subr.bf16.mxu0 0
        %409 = vmatpush1.bf16.msra.mxu0 0
        %410 = vmatprep.subr.bf16.mxu0 0
        %411 = vmatpush1.bf16.msra.mxu0 0
        %412 = vmatprep.subr.bf16.mxu0 0
        %413 = vmatpush1.bf16.msra.mxu0 0
        %414 = vmatprep.subr.bf16.mxu0 0
        %415 = vmatpush1.bf16.msra.mxu0 0
        %416 = vmatprep.subr.bf16.mxu0 0
        %417 = vmatpush1.bf16.msra.mxu0 0
        %418 = vmatprep.subr.bf16.mxu0 0
        %419 = vmatpush1.bf16.msra.mxu0 0
        %420 = vmatprep.subr.bf16.mxu0 0
        %421 = vmatpush1.bf16.msra.mxu0 0
        %422 = vmatprep.subr.bf16.mxu0 0
        %423 = vmatpush1.bf16.msra.mxu0 0
        %424 = vmatprep.subr.bf16.mxu0 0
        %425 = vmatpush1.bf16.msra.mxu0 0
        %426 = vmatprep.subr.bf16.mxu0 0
        %427 = vmatpush1.bf16.msra.mxu0 0
        %428 = vmatprep.mubr.bf16.mxu0 0
        %429 = vmatmul.mubr.bf16.gmra.mrb[0].mxu0 %v390
        %v430 = vpop.f32.mrb[0].mxu0
        %v431 = vadd.f32 0.0, %v430
        %v432 = vpop.f32.mrb[0].mxu0
        %v433 = vpop.f32.mrb[0].mxu0
        %v434 = vpop.f32.mrb[0].mxu0
        %435 = vdwg.mxu0
        %v436 = vadd.f32 %v386, %v431
        %437 = vst.msk [vmem:[#allocation5] sm:$0xff] %vm308, %v436
        %438 = vst.msk [vmem:[#allocation3] sm:$0xff] %vm378, %v360
        %p439 = scmp.eq.s32.totalorder %s30, 1
        // Predicated region
        $region49: #{tpu_custom_call.1} parent=31 // pred_check
          %p440 = pneg %p439
        $region50: #{tpu_custom_call.1} parent=31 // pred_check_branch
          %442 = sbr.rel (%p440) target = $region52
        $region51: #{tpu_custom_call.1} parent=31 // pred_region
          %v443 = vld [vmem:[#allocation5] sm:$0xff]
          %v444 = vld [vmem:[#allocation4] sm:$0xff]
          %v445 = vrcp.pop %v444
          %v446 = vmul.f32 1.0, %v445
          %448 = vset.pattern.permute.xlu0 0
          %449 = vperm.xlu0 %448, %v446
          %v450 = vpop.permute.xlu0 %449
          %v452 = vmul.f32 %v443, %v450
          %v453 = vpack.c.bf16 %v452, %v452
          %vm454 = vcmask 257024
          %455 = vst.msk [vmem:[%s290] sm:$0xf] %vm454, %v453
        $region52: #{tpu_custom_call.1} parent=31 // pred_fallthru
          _
        %s456 = sand.u32 %s136, 1
        %s457 = scalar_lea.sflag [#allocation8], %s456
        %s458 = sand.u32 %s136, 1
        %s459 = smul.addr %s458, 4
        %s460 = scalar_lea.vmem [#allocation12], %s459
        // Predicated region
        $region53: #{tpu_custom_call.1} parent=31 // pred_check
          %p461 = pneg %p146
        $region54: #{tpu_custom_call.1} parent=31 // pred_check_branch
          %463 = sbr.rel (%p461) target = $region56
        $region55: #{tpu_custom_call.1} parent=31 // pred_region
          %s465 = ssub.s32 64, 64
          %466 = vsyncadd %s457, %s465
          %s467 = smul.addr %s28, 2
          %s468 = sadd.s32 %s29, %s467
          %s469 = smul.addr %s468, 64
          %s470 = scalar_lea.hbm %s3, %s469
          %s472 = sshll.u32 %s460, 4
          %s473 = int_to_ptr.vmem [resolvable:$true] %s472
          %475 = dma.vmem_to_hbm [thread:$0]  %s473, 64, %s470, %s457
        $region56: #{tpu_custom_call.1} parent=31 // pred_fallthru
          _
      $region32: #{tpu_custom_call.1} parent=5 // pred_fallthru
        _
      %p476 = scmp.le.s32.totalorder 2, %s18
      // Predicated region
      $region57: #{tpu_custom_call.1} parent=5 // pred_check
        %p477 = pneg %p476
      $region58: #{tpu_custom_call.1} parent=5 // pred_check_branch
        %479 = sbr.rel (%p477) target = $region60
      $region59: #{tpu_custom_call.1} parent=5 // pred_region
        %s480 = ssub.s32 %s18, 2
        // Predicated region
        $region61: #{tpu_custom_call.1} parent=59 // pred_check
          %p481 = pneg %p152
        $region62: #{tpu_custom_call.1} parent=59 // pred_check_branch
          %483 = sbr.rel (%p481) target = $region64
        $region63: #{tpu_custom_call.1} parent=59 // pred_region
          %s484 = sand.u32 %s137, 1
          %s485 = scalar_lea.sflag [#allocation8], %s484
          %s486 = sand.u32 %s137, 1
          %s487 = smul.addr %s486, 4
          %s488 = scalar_lea.vmem [#allocation12], %s487
          %489 = dma.done %s485, 64
        $region64: #{tpu_custom_call.1} parent=59 // pred_fallthru
          _
      $region60: #{tpu_custom_call.1} parent=5 // pred_fallthru
        _
    $region6: #{tpu_custom_call.1} parent=1 // loop_footer
      %s22 = sadd.s32 1, %s18
    $region7: #{tpu_custom_call.1} parent=1 // loop_footer_branch
      %17 = sbr.rel target = $region3
    $region8: #{tpu_custom_call.1} parent=1 // loop_exit
      _
    %490 = vsyncpa [#allocation7], 1
    %s491 = scalar_lea.sflag [#allocation7], 1
    %492 = vsyncpa %s491, 1
    %493 = vsyncpa [#allocation10], 1
    %s494 = scalar_lea.sflag [#allocation10], 1
    %495 = vsyncpa %s494, 1
    %496 = vsyncpa [#allocation8], 1
    %s497 = scalar_lea.sflag [#allocation8], 1
    %498 = vsyncpa %s497, 1

</llo_original>
